<compile_context>
chip_gen: v6e
topology: v6e:2x2x1
jax: 0.10.0
libtpu: 0.0.40
codegen_flags: <defaults>
</compile_context>

<pallas_src>
import jax
import jax.numpy as jnp
from jax.experimental import pallas as pl
from jax.experimental.pallas import tpu as pltpu

_LANE = 128
_SUB = 8


def _round_up(a, b):
    return ((a + b - 1) // b) * b


def _choose_tiling(m, target_rows=2048, min_good_rows=256):
    """Per-sample view is (rows, 128); block is (tile_rows, 128).

    Returns (m_pad, rows, tile_rows).  tile_rows is a multiple of 8 dividing
    rows; ~1 MiB f32 per operand block.  Padding is only introduced when M is
    not a multiple of 1024, or (last resort) when rows has no decent divisor.
    """
    m_pad = _round_up(m, _LANE * _SUB)
    rows = m_pad // _LANE                      # multiple of 8
    if rows <= target_rows:
        return m_pad, rows, rows
    tr = _SUB
    cand = (target_rows // _SUB) * _SUB
    while cand >= _SUB:
        if rows % cand == 0:
            tr = cand
            break
        cand -= _SUB
    if tr < min_good_rows:
        # Divisor structure is unfriendly: pad rows up so we can use a big tile.
        tr = target_rows
        rows = _round_up(rows, tr)
        m_pad = rows * _LANE
    return m_pad, rows, tr


def _bce_dice_kernel(x_ref, t_ref, bce_ref, inter_ref, pt_ref):
    """One (sample, chunk) grid step: accumulate per-sample partial sums.

    x_ref/t_ref: (1, TR, 128) blocks.  Outputs (1, 1, 1) blocks are resident
    across the chunk axis (index map constant in j) -> used as accumulators.
    """
    j = pl.program_id(1)

    @pl.when(j == 0)
    def _():
        bce_ref[...] = jnp.zeros_like(bce_ref)
        inter_ref[...] = jnp.zeros_like(inter_ref)
        pt_ref[...] = jnp.zeros_like(pt_ref)

    # Cast to f32 right after the VMEM load (inputs may be bf16 / int8).
    x = x_ref[...].astype(jnp.float32)
    t = t_ref[...].astype(jnp.float32)

    # One exp(-|x|) feeds both the stable BCE-with-logits term and the exact
    # sigmoid; (1 + e) is shared for the divide.
    e = jnp.exp(-jnp.abs(x))
    one_plus_e = 1.0 + e
    bce = jnp.maximum(x, 0.0) - x * t + jnp.log1p(e)
    p = jnp.where(x >= 0.0, 1.0, e) / one_plus_e

    # Lane+sublane reductions (XLU) -> (1,1,1) partials, accumulated in-place.
    bce_ref[...] += jnp.sum(bce, axis=(1, 2), keepdims=True)
    inter_ref[...] += jnp.sum(p * t, axis=(1, 2), keepdims=True)
    pt_ref[...] += jnp.sum(p + t, axis=(1, 2), keepdims=True)


def bce_dice_loss(x, target):
    """x, target: (N, C, H, W).  Returns scalar float32 loss.

    Matches BCEDiceLoss(size_average=True).forward(x, target, weight=None).
    """
    # TODO(synk): per-element `weight` path not implemented (module default is weight=None).
    n = x.shape[0]
    xf = jnp.reshape(x, (n, -1))
    tf = jnp.reshape(target, (n, -1))
    if tf.dtype == jnp.bool_:
        tf = tf.astype(jnp.int8)   # cheap; f32 upcast happens inside the kernel
    m = xf.shape[1]

    m_pad, rows, tr = _choose_tiling(m)
    pad = m_pad - m
    if pad:
        xf = jnp.pad(xf, ((0, 0), (0, pad)))
        tf = jnp.pad(tf, ((0, 0), (0, pad)))
    x3 = xf.reshape(n, rows, _LANE)
    t3 = tf.reshape(n, rows, _LANE)
    chunks = rows // tr

    in_spec = pl.BlockSpec((1, tr, _LANE), lambda i, j: (i, j, 0))
    out_spec = pl.BlockSpec((1, 1, 1), lambda i, j: (i, 0, 0))

    bce_p, inter_p, pt_p = pl.pallas_call(
        _bce_dice_kernel,
        out_shape=tuple(
            jax.ShapeDtypeStruct((n, 1, 1), jnp.float32) for _ in range(3)
        ),
        grid=(n, chunks),
        in_specs=[in_spec, in_spec],
        out_specs=(out_spec, out_spec, out_spec),
        compiler_params=pltpu.CompilerParams(
            dimension_semantics=("parallel", "arbitrary"),
        ),
    )(x3, t3)

    # Exact padding correction (padded x=t=0 contributes ln2 to BCE, 0.5 to p+t).
    ln2 = 0.6931471805599453
    bce_sum = jnp.sum(bce_p) - jnp.float32(n * pad) * ln2
    bce_mean = bce_sum / jnp.float32(n * m)

    inter = inter_p.reshape(n)                          # per-sample sum(p*t)
    pts = pt_p.reshape(n) - jnp.float32(pad) * 0.5      # per-sample sum(p)+sum(t)
    scores = 2.0 * (inter + 1.0) / (pts + 1.0)
    score = jnp.clip(jnp.sum(scores) / jnp.float32(n), 0.0, 1.0)
    return bce_mean + (1.0 - score)


if __name__ == "__main__":
    key = jax.random.PRNGKey(0)
    k1, k2 = jax.random.split(key)
    # Small NCHW shapes: batch=2, channels=4, spatial=16x16 -> M = 1024.
    x = jax.random.normal(k1, (2, 4, 16, 16), dtype=jnp.float32)
    target = jax.random.bernoulli(k2, 0.5, (2, 4, 16, 16)).astype(jnp.float32)

    loss = bce_dice_loss(x, target)
    jax.block_until_ready(loss)

    # Pure-JAX reference (same math as the PyTorch module), outside Pallas.
    xf = x.reshape(2, -1)
    tf = target.reshape(2, -1)
    bce_ref = jnp.mean(jnp.maximum(xf, 0) - xf * tf + jnp.log1p(jnp.exp(-jnp.abs(xf))))
    p = jax.nn.sigmoid(xf)
    scores = 2.0 * ((p * tf).sum(1) + 1.0) / (p.sum(1) + tf.sum(1) + 1.0)
    ref = bce_ref + (1.0 - jnp.clip(scores.mean(), 0.0, 1.0))
    assert jnp.allclose(loss, ref, rtol=1e-5, atol=1e-5), (loss, ref)

    print("KERNEL_OK")
</pallas_src>

<mosaic_0001>
module attributes {stable_mosaic.version = 11 : i64} {
  func.func @_bce_dice_kernel(%arg0: i32, %arg1: i32, %arg2: memref<1x8x128xf32, #tpu.memory_space<vmem>>, %arg3: memref<1x8x128xf32, #tpu.memory_space<vmem>>, %arg4: memref<1x1x1xf32, #tpu.memory_space<vmem>>, %arg5: memref<1x1x1xf32, #tpu.memory_space<vmem>>, %arg6: memref<1x1x1xf32, #tpu.memory_space<vmem>>) attributes {dimension_semantics = [#tpu.dimension_semantics<parallel>, #tpu.dimension_semantics<arbitrary>], iteration_bounds = array<i64: 2, 1>, scalar_prefetch = 0 : i64, scratch_operands = 0 : i64, tpu.core_type = #tpu.core_type<tc>, window_params = [{transform_indices = @transform_0, window_bounds = array<i64: 1, 8, 128>}, {transform_indices = @transform_1, window_bounds = array<i64: 1, 8, 128>}, {transform_indices = @transform_2, window_bounds = array<i64: 1, 1, 1>}, {transform_indices = @transform_3, window_bounds = array<i64: 1, 1, 1>}, {transform_indices = @transform_4, window_bounds = array<i64: 1, 1, 1>}]} {
    %c0_i32 = arith.constant 0 : i32
    %0 = arith.cmpi eq, %arg1, %c0_i32 : i32
    %1 = arith.extui %0 : i1 to i32
    %c0_i32_0 = arith.constant 0 : i32
    %2 = arith.cmpi ne, %1, %c0_i32_0 : i32
    scf.if %2 {
      %cst_31 = arith.constant 0.000000e+00 : f32
      %39 = vector.broadcast %cst_31 : f32 to vector<1x1x1xf32>
      %c0_32 = arith.constant 0 : index
      %c0_33 = arith.constant 0 : index
      %c0_34 = arith.constant 0 : index
      %40 = vector.load %arg4[%c0_32, %c0_33, %c0_34] : memref<1x1x1xf32, #tpu.memory_space<vmem>>, vector<1x1x1xf32>
      tpu.vector_store %arg4[%c0_32, %c0_33, %c0_34], %39 {strides = array<i32>} : memref<1x1x1xf32, #tpu.memory_space<vmem>>, vector<1x1x1xf32>,
      %cst_35 = arith.constant 0.000000e+00 : f32
      %41 = vector.broadcast %cst_35 : f32 to vector<1x1x1xf32>
      %c0_36 = arith.constant 0 : index
      %c0_37 = arith.constant 0 : index
      %c0_38 = arith.constant 0 : index
      %42 = vector.load %arg5[%c0_36, %c0_37, %c0_38] : memref<1x1x1xf32, #tpu.memory_space<vmem>>, vector<1x1x1xf32>
      tpu.vector_store %arg5[%c0_36, %c0_37, %c0_38], %41 {strides = array<i32>} : memref<1x1x1xf32, #tpu.memory_space<vmem>>, vector<1x1x1xf32>,
      %cst_39 = arith.constant 0.000000e+00 : f32
      %43 = vector.broadcast %cst_39 : f32 to vector<1x1x1xf32>
      %c0_40 = arith.constant 0 : index
      %c0_41 = arith.constant 0 : index
      %c0_42 = arith.constant 0 : index
      %44 = vector.load %arg6[%c0_40, %c0_41, %c0_42] : memref<1x1x1xf32, #tpu.memory_space<vmem>>, vector<1x1x1xf32>
      tpu.vector_store %arg6[%c0_40, %c0_41, %c0_42], %43 {strides = array<i32>} : memref<1x1x1xf32, #tpu.memory_space<vmem>>, vector<1x1x1xf32>,
    } else {
    }
    %c0 = arith.constant 0 : index
    %c0_1 = arith.constant 0 : index
    %c0_2 = arith.constant 0 : index
    %3 = vector.load %arg2[%c0, %c0_1, %c0_2] : memref<1x8x128xf32, #tpu.memory_space<vmem>>, vector<1x8x128xf32>
    %c0_3 = arith.constant 0 : index
    %c0_4 = arith.constant 0 : index
    %c0_5 = arith.constant 0 : index
    %4 = vector.load %arg3[%c0_3, %c0_4, %c0_5] : memref<1x8x128xf32, #tpu.memory_space<vmem>>, vector<1x8x128xf32>
    %5 = math.absf %3 : vector<1x8x128xf32>
    %cst = arith.constant 0.000000e+00 : f32
    %6 = vector.broadcast %cst : f32 to vector<1x8x128xf32>
    %7 = arith.subf %6, %5 : vector<1x8x128xf32>
    %8 = math.exp %7 : vector<1x8x128xf32>
    %cst_6 = arith.constant 1.000000e+00 : f32
    %9 = vector.broadcast %cst_6 : f32 to vector<1x8x128xf32>
    %10 = arith.addf %9, %8 : vector<1x8x128xf32>
    %cst_7 = arith.constant 0.000000e+00 : f32
    %11 = vector.broadcast %cst_7 : f32 to vector<1x8x128xf32>
    %12 = arith.maximumf %3, %11 : vector<1x8x128xf32>
    %13 = arith.mulf %3, %4 : vector<1x8x128xf32>
    %14 = arith.subf %12, %13 : vector<1x8x128xf32>
    %15 = math.log1p %8 : vector<1x8x128xf32>
    %16 = arith.addf %14, %15 : vector<1x8x128xf32>
    %cst_8 = arith.constant 0.000000e+00 : f32
    %17 = vector.broadcast %cst_8 : f32 to vector<1x8x128xf32>
    %18 = arith.cmpf oge, %3, %17 : vector<1x8x128xf32>
    %cst_9 = arith.constant 1.000000e+00 : f32
    %19 = vector.broadcast %cst_9 : f32 to vector<1x8x128xf32>
    %20 = arith.select %18, %19, %8 : vector<1x8x128xi1>, vector<1x8x128xf32>
    %21 = arith.divf %20, %10 : vector<1x8x128xf32>
    %c0_10 = arith.constant 0 : index
    %c0_11 = arith.constant 0 : index
    %c0_12 = arith.constant 0 : index
    %22 = vector.load %arg4[%c0_10, %c0_11, %c0_12] : memref<1x1x1xf32, #tpu.memory_space<vmem>>, vector<1x1x1xf32>
    %cst_13 = arith.constant dense<0.000000e+00> : vector<1xf32>
    %23 = vector.multi_reduction <add>, %16, %cst_13 [1, 2] : vector<1x8x128xf32> to vector<1xf32>
    %24 = vector.shape_cast %23 : vector<1xf32> to vector<1x1x1xf32>
    %25 = arith.addf %22, %24 : vector<1x1x1xf32>
    %c0_14 = arith.constant 0 : index
    %c0_15 = arith.constant 0 : index
    %c0_16 = arith.constant 0 : index
    %26 = vector.load %arg4[%c0_14, %c0_15, %c0_16] : memref<1x1x1xf32, #tpu.memory_space<vmem>>, vector<1x1x1xf32>
    tpu.vector_store %arg4[%c0_14, %c0_15, %c0_16], %25 {strides = array<i32>} : memref<1x1x1xf32, #tpu.memory_space<vmem>>, vector<1x1x1xf32>,
    %c0_17 = arith.constant 0 : index
    %c0_18 = arith.constant 0 : index
    %c0_19 = arith.constant 0 : index
    %27 = vector.load %arg5[%c0_17, %c0_18, %c0_19] : memref<1x1x1xf32, #tpu.memory_space<vmem>>, vector<1x1x1xf32>
    %28 = arith.mulf %21, %4 : vector<1x8x128xf32>
    %cst_20 = arith.constant dense<0.000000e+00> : vector<1xf32>
    %29 = vector.multi_reduction <add>, %28, %cst_20 [1, 2] : vector<1x8x128xf32> to vector<1xf32>
    %30 = vector.shape_cast %29 : vector<1xf32> to vector<1x1x1xf32>
    %31 = arith.addf %27, %30 : vector<1x1x1xf32>
    %c0_21 = arith.constant 0 : index
    %c0_22 = arith.constant 0 : index
    %c0_23 = arith.constant 0 : index
    %32 = vector.load %arg5[%c0_21, %c0_22, %c0_23] : memref<1x1x1xf32, #tpu.memory_space<vmem>>, vector<1x1x1xf32>
    tpu.vector_store %arg5[%c0_21, %c0_22, %c0_23], %31 {strides = array<i32>} : memref<1x1x1xf32, #tpu.memory_space<vmem>>, vector<1x1x1xf32>,
    %c0_24 = arith.constant 0 : index
    %c0_25 = arith.constant 0 : index
    %c0_26 = arith.constant 0 : index
    %33 = vector.load %arg6[%c0_24, %c0_25, %c0_26] : memref<1x1x1xf32, #tpu.memory_space<vmem>>, vector<1x1x1xf32>
    %34 = arith.addf %21, %4 : vector<1x8x128xf32>
    %cst_27 = arith.constant dense<0.000000e+00> : vector<1xf32>
    %35 = vector.multi_reduction <add>, %34, %cst_27 [1, 2] : vector<1x8x128xf32> to vector<1xf32>
    %36 = vector.shape_cast %35 : vector<1xf32> to vector<1x1x1xf32>
    %37 = arith.addf %33, %36 : vector<1x1x1xf32>
    %c0_28 = arith.constant 0 : index
    %c0_29 = arith.constant 0 : index
    %c0_30 = arith.constant 0 : index
    %38 = vector.load %arg6[%c0_28, %c0_29, %c0_30] : memref<1x1x1xf32, #tpu.memory_space<vmem>>, vector<1x1x1xf32>
    tpu.vector_store %arg6[%c0_28, %c0_29, %c0_30], %37 {strides = array<i32>} : memref<1x1x1xf32, #tpu.memory_space<vmem>>, vector<1x1x1xf32>,
    return
  }
  func.func @transform_0(%arg0: i32, %arg1: i32) -> (i32, i32, i32) {
    %c0_i32 = arith.constant 0 : i32
    %c0_i32_0 = arith.constant 0 : i32
    return %arg0, %arg1, %c0_i32 : i32, i32, i32
  }
  func.func @transform_1(%arg0: i32, %arg1: i32) -> (i32, i32, i32) {
    %c0_i32 = arith.constant 0 : i32
    %c0_i32_0 = arith.constant 0 : i32
    return %arg0, %arg1, %c0_i32 : i32, i32, i32
  }
  func.func @transform_2(%arg0: i32, %arg1: i32) -> (i32, i32, i32) {
    %c0_i32 = arith.constant 0 : i32
    %c0_i32_0 = arith.constant 0 : i32
    %c0_i32_1 = arith.constant 0 : i32
    return %arg0, %c0_i32, %c0_i32_0 : i32, i32, i32
  }
  func.func @transform_3(%arg0: i32, %arg1: i32) -> (i32, i32, i32) {
    %c0_i32 = arith.constant 0 : i32
    %c0_i32_0 = arith.constant 0 : i32
    %c0_i32_1 = arith.constant 0 : i32
    return %arg0, %c0_i32, %c0_i32_0 : i32, i32, i32
  }
  func.func @transform_4(%arg0: i32, %arg1: i32) -> (i32, i32, i32) {
    %c0_i32 = arith.constant 0 : i32
    %c0_i32_0 = arith.constant 0 : i32
    %c0_i32_1 = arith.constant 0 : i32
    return %arg0, %c0_i32, %c0_i32_0 : i32, i32, i32
  }
}

</mosaic_0001>

<llo_original>
// kernel: tpu_custom_call.1
$region0: #{tpu_custom_call.1}
  #allocation0 [shape = 'u32[]', space=smem, size = 0x4, offset = 0x4, fixed_abs, tag = 'smem constant byte address 0x4 - core index']
  #allocation1 [shape = 'u32[144,128]{1,0:T(1,128)}', space=vmem, size = 0x12000, scoped, tag = 'internal scratch']
  %s0 = inlined_call_operand.hbm [shape: f32[2,8,128], index: 0, kind: input, shape index: {}]
  %s1 = inlined_call_operand.hbm [shape: f32[2,8,128], index: 1, kind: input, shape index: {}]
  %s2 = inlined_call_operand.vmem [shape: f32[2,1,1], index: 2, kind: output, shape index: {0}]
  %s3 = inlined_call_operand.vmem [shape: f32[2,1,1], index: 3, kind: output, shape index: {1}]
  %s4 = inlined_call_operand.vmem [shape: f32[2,1,1], index: 4, kind: output, shape index: {2}]
  %5 = xla_tuple %s2, %s3, %s4
  %s6 = sld [smem:[#allocation0]]
  $region69: #{tpu_custom_call.1} parent=0
    _
  %s8 = ssub.s32 1, %s6
  %s9 = scalar_select 0, %s8, %s6
  $region1: #{tpu_custom_call.1} parent=0
    #allocation2 [shape = 'u8[8192]{0}', space=vmem, size = 0x2000, scoped, tag = 'input window, operand 0']
    #allocation3 [shape = 's32[2]{0}', space=sflag, size = 0x8, scoped, tag = 'scoped memory for tpu_custom_call.1']
    #allocation4 [shape = 'u8[8192]{0}', space=vmem, size = 0x2000, scoped, tag = 'input window, operand 1']
    #allocation5 [shape = 's32[2]{0}', space=sflag, size = 0x8, scoped, tag = 'scoped memory for tpu_custom_call.1']
    %10 = vsyncpa [#allocation3], 0
    %s11 = scalar_lea.sflag [#allocation3], 1
    %12 = vsyncpa %s11, 0
    %13 = vsyncpa [#allocation5], 0
    %s14 = scalar_lea.sflag [#allocation5], 1
    %15 = vsyncpa %s14, 0
    loop: start=0, step=1, limit=4
    $region2: #{tpu_custom_call.1} parent=1 // loop_pre_header
      _
    $region3: #{tpu_custom_call.1} parent=1 // loop_header
      %s17 = sphi 0, %s21
      %p18 = scmp.ge.s32.totalorder %s17, 4
      %s24 = sphi 0, %s36
      %s25 = sphi 0, %s32
      %s26 = sphi 0, %s24
      %s27 = sphi 0, %s25
      %s28 = sphi 0, %s26
      %s29 = sphi 0, %s27
      %s41 = sphi 0, %s43
      %s44 = sphi 0, %s41
      %s45 = sphi 0, %s44
      %s61 = sphi 0, %s45
      %s69 = sphi 0, %s71
      %s72 = sphi 0, %s69
      %s73 = sphi 0, %s72
      %s89 = sphi 0, %s73
      %s95 = sphi 0, %s97
      %s98 = sphi 0, %s95
      %s99 = sphi 0, %s98
      %s115 = sphi 0, %s99
      %s121 = sphi 0, %s123
      %s124 = sphi 0, %s121
      %s125 = sphi 0, %s124
      %s141 = sphi 0, %s125
      %s147 = sphi 0, %s149
      %s150 = sphi 0, %s147
      %s151 = sphi 0, %s150
      %s167 = sphi 0, %s151
    $region4: #{tpu_custom_call.1} parent=1 // loop_header_branch
      %20 = sbr.rel (%p18) target = $region8
    $region5: #{tpu_custom_call.1} parent=1 // loop_body
      %s22 = ssub.s32 %s17, 1
      %s23 = ssub.s32 %s17, 2
      %s30 = sadd.s32 1, %s25
      %p31 = scmp.ge.s32.totalorder %s30, 1
      %s32 = scalar_select %p31, 0, %s30
      %s33 = sadd.s32 1, %s24
      %s34 = scalar_select %p31, %s33, %s24
      %p35 = scmp.ge.s32.totalorder %s34, 2
      %s36 = scalar_select %p35, 0, %s34
      %s37 = ssub.s32 %s24, %s36
      %s38 = ssub.s32 %s25, %s32
      %s39 = sor.u32 %s37, %s38
      %p40 = scmp.eq.s32.totalorder %s39, 0
      %s42 = sadd.s32 %s41, 1
      %s43 = scalar_select %p40, %s41, %s42
      %p46 = pneg %p40
      %p47 = scmp.eq.s32.totalorder %s17, 1
      %p48 = por %p46, %p47
      %p49 = scmp.ne.s32.totalorder %s41, %s44
      %p50 = scmp.eq.s32.totalorder %s17, 0
      %p51 = por %p49, %p50
      %p52 = scmp.ne.s32.totalorder %s41, %s44
      %p53 = scmp.eq.s32.totalorder %s22, 1
      %p54 = por %p52, %p53
      %p55 = scmp.ne.s32.totalorder %s44, %s45
      %p56 = scmp.eq.s32.totalorder %s22, 0
      %p57 = por %p55, %p56
      %p58 = scmp.ne.s32.totalorder %s44, %s45
      %p59 = scmp.eq.s32.totalorder %s23, 1
      %p60 = por %p58, %p59
      %p62 = scmp.ne.s32.totalorder %s45, %s61
      %p63 = scmp.eq.s32.totalorder %s23, 0
      %p64 = por %p62, %p63
      %s65 = ssub.s32 %s24, %s36
      %s66 = ssub.s32 %s25, %s32
      %s67 = sor.u32 %s65, %s66
      %p68 = scmp.eq.s32.totalorder %s67, 0
      %s70 = sadd.s32 %s69, 1
      %s71 = scalar_select %p68, %s69, %s70
      %p74 = pneg %p68
      %p75 = scmp.eq.s32.totalorder %s17, 1
      %p76 = por %p74, %p75
      %p77 = scmp.ne.s32.totalorder %s69, %s72
      %p78 = scmp.eq.s32.totalorder %s17, 0
      %p79 = por %p77, %p78
      %p80 = scmp.ne.s32.totalorder %s69, %s72
      %p81 = scmp.eq.s32.totalorder %s22, 1
      %p82 = por %p80, %p81
      %p83 = scmp.ne.s32.totalorder %s72, %s73
      %p84 = scmp.eq.s32.totalorder %s22, 0
      %p85 = por %p83, %p84
      %p86 = scmp.ne.s32.totalorder %s72, %s73
      %p87 = scmp.eq.s32.totalorder %s23, 1
      %p88 = por %p86, %p87
      %p90 = scmp.ne.s32.totalorder %s73, %s89
      %p91 = scmp.eq.s32.totalorder %s23, 0
      %p92 = por %p90, %p91
      %s93 = ssub.s32 %s24, %s36
      %p94 = scmp.eq.s32.totalorder %s93, 0
      %s96 = sadd.s32 %s95, 1
      %s97 = scalar_select %p94, %s95, %s96
      %p100 = pneg %p94
      %p101 = scmp.eq.s32.totalorder %s17, 1
      %p102 = por %p100, %p101
      %p103 = scmp.ne.s32.totalorder %s95, %s98
      %p104 = scmp.eq.s32.totalorder %s17, 0
      %p105 = por %p103, %p104
      %p106 = scmp.ne.s32.totalorder %s95, %s98
      %p107 = scmp.eq.s32.totalorder %s22, 1
      %p108 = por %p106, %p107
      %p109 = scmp.ne.s32.totalorder %s98, %s99
      %p110 = scmp.eq.s32.totalorder %s22, 0
      %p111 = por %p109, %p110
      %p112 = scmp.ne.s32.totalorder %s98, %s99
      %p113 = scmp.eq.s32.totalorder %s23, 1
      %p114 = por %p112, %p113
      %p116 = scmp.ne.s32.totalorder %s99, %s115
      %p117 = scmp.eq.s32.totalorder %s23, 0
      %p118 = por %p116, %p117
      %s119 = ssub.s32 %s24, %s36
      %p120 = scmp.eq.s32.totalorder %s119, 0
      %s122 = sadd.s32 %s121, 1
      %s123 = scalar_select %p120, %s121, %s122
      %p126 = pneg %p120
      %p127 = scmp.eq.s32.totalorder %s17, 1
      %p128 = por %p126, %p127
      %p129 = scmp.ne.s32.totalorder %s121, %s124
      %p130 = scmp.eq.s32.totalorder %s17, 0
      %p131 = por %p129, %p130
      %p132 = scmp.ne.s32.totalorder %s121, %s124
      %p133 = scmp.eq.s32.totalorder %s22, 1
      %p134 = por %p132, %p133
      %p135 = scmp.ne.s32.totalorder %s124, %s125
      %p136 = scmp.eq.s32.totalorder %s22, 0
      %p137 = por %p135, %p136
      %p138 = scmp.ne.s32.totalorder %s124, %s125
      %p139 = scmp.eq.s32.totalorder %s23, 1
      %p140 = por %p138, %p139
      %p142 = scmp.ne.s32.totalorder %s125, %s141
      %p143 = scmp.eq.s32.totalorder %s23, 0
      %p144 = por %p142, %p143
      %s145 = ssub.s32 %s24, %s36
      %p146 = scmp.eq.s32.totalorder %s145, 0
      %s148 = sadd.s32 %s147, 1
      %s149 = scalar_select %p146, %s147, %s148
      %p152 = pneg %p146
      %p153 = scmp.eq.s32.totalorder %s17, 1
      %p154 = por %p152, %p153
      %p155 = scmp.ne.s32.totalorder %s147, %s150
      %p156 = scmp.eq.s32.totalorder %s17, 0
      %p157 = por %p155, %p156
      %p158 = scmp.ne.s32.totalorder %s147, %s150
      %p159 = scmp.eq.s32.totalorder %s22, 1
      %p160 = por %p158, %p159
      %p161 = scmp.ne.s32.totalorder %s150, %s151
      %p162 = scmp.eq.s32.totalorder %s22, 0
      %p163 = por %p161, %p162
      %p164 = scmp.ne.s32.totalorder %s150, %s151
      %p165 = scmp.eq.s32.totalorder %s23, 1
      %p166 = por %p164, %p165
      %p168 = scmp.ne.s32.totalorder %s151, %s167
      %p169 = scmp.eq.s32.totalorder %s23, 0
      %p170 = por %p168, %p169
      %p171 = scmp.le.s32.totalorder 1, %s17
      %p172 = scmp.lt.s32.totalorder %s17, 3
      %p173 = pnand %p171, %p172
      %p174 = pneg %p173
      // Predicated region
      $region9: #{tpu_custom_call.1} parent=5 // pred_check
        _
      $region10: #{tpu_custom_call.1} parent=5 // pred_check_branch
        %176 = sbr.rel (%p173) target = $region12
      $region11: #{tpu_custom_call.1} parent=5 // pred_region
        %s177 = ssub.s32 %s17, 1
      $region12: #{tpu_custom_call.1} parent=5 // pred_fallthru
        _
      %p178 = scmp.lt.s32.totalorder %s17, 2
      // Predicated region
      $region13: #{tpu_custom_call.1} parent=5 // pred_check
        %p179 = pneg %p178
      $region14: #{tpu_custom_call.1} parent=5 // pred_check_branch
        %181 = sbr.rel (%p179) target = $region16
      $region15: #{tpu_custom_call.1} parent=5 // pred_region
        // Predicated region
        $region17: #{tpu_custom_call.1} parent=15 // pred_check
          %p182 = pneg %p51
        $region18: #{tpu_custom_call.1} parent=15 // pred_check_branch
          %184 = sbr.rel (%p182) target = $region20
        $region19: #{tpu_custom_call.1} parent=15 // pred_region
          %s185 = sand.u32 %s41, 1
          %s186 = scalar_lea.sflag [#allocation3], %s185
          %s187 = sand.u32 %s41, 1
          %s188 = smul.addr %s187, 8
          %s189 = scalar_lea.vmem [#allocation2], %s188
          %s191 = ssub.s32 128, 128
          %192 = vsyncadd %s186, %s191
          %s193 = sadd.s32 %s25, %s24
          %s194 = smul.addr %s193, 128
          %s195 = scalar_lea.hbm %s0, %s194
          %s197 = sshll.u32 %s189, 4
          %s198 = int_to_ptr.vmem [resolvable:$true] %s197
          %200 = dma.hbm_to_vmem [thread:$0]  %s195, 128, %s198, %s186
        $region20: #{tpu_custom_call.1} parent=15 // pred_fallthru
          _
        // Predicated region
        $region21: #{tpu_custom_call.1} parent=15 // pred_check
          %p201 = pneg %p79
        $region22: #{tpu_custom_call.1} parent=15 // pred_check_branch
          %203 = sbr.rel (%p201) target = $region24
        $region23: #{tpu_custom_call.1} parent=15 // pred_region
          %s204 = sand.u32 %s69, 1
          %s205 = scalar_lea.sflag [#allocation5], %s204
          %s206 = sand.u32 %s69, 1
          %s207 = smul.addr %s206, 8
          %s208 = scalar_lea.vmem [#allocation4], %s207
          %s210 = ssub.s32 128, 128
          %211 = vsyncadd %s205, %s210
          %s212 = sadd.s32 %s25, %s24
          %s213 = smul.addr %s212, 128
          %s214 = scalar_lea.hbm %s1, %s213
          %s216 = sshll.u32 %s208, 4
          %s217 = int_to_ptr.vmem [resolvable:$true] %s216
          %219 = dma.hbm_to_vmem [thread:$0]  %s214, 128, %s217, %s205
        $region24: #{tpu_custom_call.1} parent=15 // pred_fallthru
          _
      $region16: #{tpu_custom_call.1} parent=5 // pred_fallthru
        _
      %p220 = scmp.le.s32.totalorder 1, %s17
      %p221 = scmp.lt.s32.totalorder %s17, 3
      %p222 = pnand %p220, %p221
      %p223 = pneg %p222
      // Predicated region
      $region25: #{tpu_custom_call.1} parent=5 // pred_check
        _
      $region26: #{tpu_custom_call.1} parent=5 // pred_check_branch
        %225 = sbr.rel (%p222) target = $region28
      $region27: #{tpu_custom_call.1} parent=5 // pred_region
        %s226 = ssub.s32 %s17, 1
        %s227 = sand.u32 %s44, 1
        %s228 = scalar_lea.sflag [#allocation3], %s227
        %s229 = sand.u32 %s44, 1
        %s230 = smul.addr %s229, 8
        %s231 = scalar_lea.vmem [#allocation2], %s230
        // Predicated region
        $region29: #{tpu_custom_call.1} parent=27 // pred_check
          %p232 = pneg %p57
        $region30: #{tpu_custom_call.1} parent=27 // pred_check_branch
          %234 = sbr.rel (%p232) target = $region32
        $region31: #{tpu_custom_call.1} parent=27 // pred_region
          %235 = dma.done %s228, 128
        $region32: #{tpu_custom_call.1} parent=27 // pred_fallthru
          _
        %s236 = sand.u32 %s72, 1
        %s237 = scalar_lea.sflag [#allocation5], %s236
        %s238 = sand.u32 %s72, 1
        %s239 = smul.addr %s238, 8
        %s240 = scalar_lea.vmem [#allocation4], %s239
        // Predicated region
        $region33: #{tpu_custom_call.1} parent=27 // pred_check
          %p241 = pneg %p85
        $region34: #{tpu_custom_call.1} parent=27 // pred_check_branch
          %243 = sbr.rel (%p241) target = $region36
        $region35: #{tpu_custom_call.1} parent=27 // pred_region
          %244 = dma.done %s237, 128
        $region36: #{tpu_custom_call.1} parent=27 // pred_fallthru
          _
        %s245 = sand.u32 %s44, 1
        %s246 = scalar_lea.sflag [#allocation3], %s245
        %s247 = sand.u32 %s44, 1
        %s248 = smul.addr %s247, 8
        %s249 = scalar_lea.vmem [#allocation2], %s248
        %p250 = pneg %p57
        %p251 = pneg %p54
        %s252 = sand.u32 %s72, 1
        %s253 = scalar_lea.sflag [#allocation5], %s252
        %s254 = sand.u32 %s72, 1
        %s255 = smul.addr %s254, 8
        %s256 = scalar_lea.vmem [#allocation4], %s255
        %p257 = pneg %p85
        %p258 = pneg %p82
        %p259 = pneg %p111
        %p260 = pneg %p108
        %p261 = scmp.lt.s32.totalorder %s26, 1
        %s262 = scalar_select %p261, %s26, 1
        %s263 = scalar_lea.vmem %s2, %s262
        %p264 = pneg %p137
        %p265 = pneg %p134
        %p266 = scmp.lt.s32.totalorder %s26, 1
        %s267 = scalar_select %p266, %s26, 1
        %s268 = scalar_lea.vmem %s3, %s267
        %p269 = pneg %p163
        %p270 = pneg %p160
        %p271 = scmp.lt.s32.totalorder %s26, 1
        %s272 = scalar_select %p271, %s26, 1
        %s273 = scalar_lea.vmem %s4, %s272
        %p274 = scmp.lt.s32.totalorder %s26, 1
        %s275 = scalar_select %p274, %s26, 1
        %s276 = scalar_lea.vmem %s2, %s275
        %p277 = scmp.lt.s32.totalorder %s26, 1
        %s278 = scalar_select %p277, %s26, 1
        %s279 = scalar_lea.vmem %s3, %s278
        %p280 = scmp.lt.s32.totalorder %s26, 1
        %s281 = scalar_select %p280, %s26, 1
        %s282 = scalar_lea.vmem %s4, %s281
        %p283 = scmp.eq.s32.totalorder %s27, 0
        // Predicated region
        $region37: #{tpu_custom_call.1} parent=27 // pred_check
          %p284 = pneg %p283
        $region38: #{tpu_custom_call.1} parent=27 // pred_check_branch
          %286 = sbr.rel (%p284) target = $region40
        $region39: #{tpu_custom_call.1} parent=27 // pred_region
          %vm287 = vcmask 0
          %288 = vst.msk [vmem:[%s276] sm:$0x1] %vm287, 0.0
          %289 = vst.msk [vmem:[%s279] sm:$0x1] %vm287, 0.0
          %290 = vst.msk [vmem:[%s282] sm:$0x1] %vm287, 0.0
        $region40: #{tpu_custom_call.1} parent=27 // pred_fallthru
          _
        %v291 = vld [vmem:[%s231] sm:$0xff]
        %v292 = vld [vmem:[%s240] sm:$0xff]
        %v293 = vand.u32 2147483647, %v291
        %v294 = vsub.f32 0.0, %v293
        %v295 = vmul.f32 %v294, 1.442695
        %v296 = vpow.pop %v295
        %v297 = vadd.f32 %v296, 1.0
        %v298 = vmax.f32 %v291, 0.0
        %v299 = vmul.f32 %v291, %v292
        %v300 = vsub.f32 %v298, %v299
        %v301 = vadd.f32 %v296, 1.0
        %v302 = vlog2.pop %v301
        %v303 = vmul.f32 %v302, 0.6931472
        %v304 = vmul.f32 -0.5, %v296
        %v305 = vadd.f32 %v304, 1.0
        %v306 = vmul.f32 %v305, %v296
        %v307 = vand.u32 2147483647, %v296
        %vm308 = vcmp.lt.f32.partialorder %v307, 0.0004427343
        %v309 = vsel %vm308, %v306, %v303
        %v310 = vadd.f32 %v300, %v309
        %vm311 = vcmp.ge.f32.partialorder %v291, 0.0
        %v312 = vsel %vm311, 1.0, %v296
        %v313 = vrcp.pop %v297
        %v314 = vmul.f32 %v312, %v313
        %v315 = vld [vmem:[%s276] sm:$0x1]
        %316 = vadd.xlane.f32.xlu0 %v310
        %v317 = vpop.xlane.xlu0 %316
        %v318 = vrot.slane %v317, 4
        %v319 = vadd.f32 %v317, %v318
        %v320 = vrot.slane %v319, 2
        %v321 = vadd.f32 %v319, %v320
        %v322 = vrot.slane %v321, 1
        %v323 = vadd.f32 %v321, %v322
        %v324 = vadd.f32 %v315, %v323
        %vm325 = vcmask 0
        %326 = vst.msk [vmem:[%s276] sm:$0x1] %vm325, %v324
        %v327 = vld [vmem:[%s279] sm:$0x1]
        %v328 = vmul.f32 %v314, %v292
        %329 = vadd.xlane.f32.xlu0 %v328
        %v330 = vpop.xlane.xlu0 %329
        %v331 = vrot.slane %v330, 4
        %v332 = vadd.f32 %v330, %v331
        %v333 = vrot.slane %v332, 2
        %v334 = vadd.f32 %v332, %v333
        %v335 = vrot.slane %v334, 1
        %v336 = vadd.f32 %v334, %v335
        %v337 = vadd.f32 %v327, %v336
        %338 = vst.msk [vmem:[%s279] sm:$0x1] %vm325, %v337
        %v339 = vld [vmem:[%s282] sm:$0x1]
        %v340 = vadd.f32 %v314, %v292
        %341 = vadd.xlane.f32.xlu0 %v340
        %v342 = vpop.xlane.xlu0 %341
        %v343 = vrot.slane %v342, 4
        %v344 = vadd.f32 %v342, %v343
        %v345 = vrot.slane %v344, 2
        %v346 = vadd.f32 %v344, %v345
        %v347 = vrot.slane %v346, 1
        %v348 = vadd.f32 %v346, %v347
        %v349 = vadd.f32 %v339, %v348
        %350 = vst.msk [vmem:[%s282] sm:$0x1] %vm325, %v349
        %p351 = scmp.lt.s32.totalorder %s26, 1
        %s352 = scalar_select %p351, %s26, 1
        %s353 = scalar_lea.vmem %s2, %s352
        %p354 = scmp.lt.s32.totalorder %s26, 1
        %s355 = scalar_select %p354, %s26, 1
        %s356 = scalar_lea.vmem %s3, %s355
        %p357 = scmp.lt.s32.totalorder %s26, 1
        %s358 = scalar_select %p357, %s26, 1
        %s359 = scalar_lea.vmem %s4, %s358
        // Predicated region
        $region41: #{tpu_custom_call.1} parent=27 // pred_check
          %p360 = pneg %p108
        $region42: #{tpu_custom_call.1} parent=27 // pred_check_branch
          %362 = sbr.rel (%p360) target = $region44
        $region43: #{tpu_custom_call.1} parent=27 // pred_region
          _
        $region44: #{tpu_custom_call.1} parent=27 // pred_fallthru
          _
        // Predicated region
        $region45: #{tpu_custom_call.1} parent=27 // pred_check
          %p363 = pneg %p134
        $region46: #{tpu_custom_call.1} parent=27 // pred_check_branch
          %365 = sbr.rel (%p363) target = $region48
        $region47: #{tpu_custom_call.1} parent=27 // pred_region
          _
        $region48: #{tpu_custom_call.1} parent=27 // pred_fallthru
          _
        // Predicated region
        $region49: #{tpu_custom_call.1} parent=27 // pred_check
          %p366 = pneg %p160
        $region50: #{tpu_custom_call.1} parent=27 // pred_check_branch
          %368 = sbr.rel (%p366) target = $region52
        $region51: #{tpu_custom_call.1} parent=27 // pred_region
          _
        $region52: #{tpu_custom_call.1} parent=27 // pred_fallthru
          _
      $region28: #{tpu_custom_call.1} parent=5 // pred_fallthru
        _
      %p369 = scmp.le.s32.totalorder 2, %s17
      // Predicated region
      $region53: #{tpu_custom_call.1} parent=5 // pred_check
        %p370 = pneg %p369
      $region54: #{tpu_custom_call.1} parent=5 // pred_check_branch
        %372 = sbr.rel (%p370) target = $region56
      $region55: #{tpu_custom_call.1} parent=5 // pred_region
        %s373 = ssub.s32 %s17, 2
        // Predicated region
        $region57: #{tpu_custom_call.1} parent=55 // pred_check
          %p374 = pneg %p114
        $region58: #{tpu_custom_call.1} parent=55 // pred_check_branch
          %376 = sbr.rel (%p374) target = $region60
        $region59: #{tpu_custom_call.1} parent=55 // pred_region
          %p377 = scmp.lt.s32.totalorder %s28, 1
          %s378 = scalar_select %p377, %s28, 1
          %s379 = scalar_lea.vmem %s2, %s378
        $region60: #{tpu_custom_call.1} parent=55 // pred_fallthru
          _
        // Predicated region
        $region61: #{tpu_custom_call.1} parent=55 // pred_check
          %p380 = pneg %p140
        $region62: #{tpu_custom_call.1} parent=55 // pred_check_branch
          %382 = sbr.rel (%p380) target = $region64
        $region63: #{tpu_custom_call.1} parent=55 // pred_region
          %p383 = scmp.lt.s32.totalorder %s28, 1
          %s384 = scalar_select %p383, %s28, 1
          %s385 = scalar_lea.vmem %s3, %s384
        $region64: #{tpu_custom_call.1} parent=55 // pred_fallthru
          _
        // Predicated region
        $region65: #{tpu_custom_call.1} parent=55 // pred_check
          %p386 = pneg %p166
        $region66: #{tpu_custom_call.1} parent=55 // pred_check_branch
          %388 = sbr.rel (%p386) target = $region68
        $region67: #{tpu_custom_call.1} parent=55 // pred_region
          %p389 = scmp.lt.s32.totalorder %s28, 1
          %s390 = scalar_select %p389, %s28, 1
          %s391 = scalar_lea.vmem %s4, %s390
        $region68: #{tpu_custom_call.1} parent=55 // pred_fallthru
          _
      $region56: #{tpu_custom_call.1} parent=5 // pred_fallthru
        _
    $region6: #{tpu_custom_call.1} parent=1 // loop_footer
      %s21 = sadd.s32 1, %s17
    $region7: #{tpu_custom_call.1} parent=1 // loop_footer_branch
      %16 = sbr.rel target = $region3
    $region8: #{tpu_custom_call.1} parent=1 // loop_exit
      _
    %392 = vsyncpa [#allocation3], 1
    %s393 = scalar_lea.sflag [#allocation3], 1
    %394 = vsyncpa %s393, 1
    %395 = vsyncpa [#allocation5], 1
    %s396 = scalar_lea.sflag [#allocation5], 1
    %397 = vsyncpa %s396, 1

</llo_original>
